<compile_context>
chip_gen: v5e
topology: v5e:2x2
jax: 0.10.0
libtpu: 0.0.40
codegen_flags: <defaults>
</compile_context>

<pallas_src>
import functools

import jax
import jax.numpy as jnp
from jax.experimental import pallas as pl
from jax.experimental.pallas import tpu as pltpu


def _round_up(x, m):
    return ((x + m - 1) // m) * m


def _cdiv(a, b):
    return (a + b - 1) // b


def _linear_kernel(x_ref, w_ref, b_ref, o_ref, acc_ref):
    # x_ref: (TM, TK) activation tile
    # w_ref: (TK, TN) weight tile, (K, N) layout -> native MXU contraction
    # b_ref: (1, TN)  f32 bias tile
    # o_ref: (TM, TN) output tile
    # acc_ref: (TM, TN) f32 VMEM accumulator (persists across the K axis)
    k = pl.program_id(2)

    @pl.when(k == 0)
    def _():
        acc_ref[...] = jnp.zeros_like(acc_ref)

    # Cast the activation tile to the weight dtype (bf16 fast path when the
    # weight was prepared in bf16); accumulation stays f32 on the MXU.
    acc_ref[...] += jnp.dot(
        x_ref[...].astype(w_ref.dtype),
        w_ref[...],
        preferred_element_type=jnp.float32,
    )

    @pl.when(k == pl.num_programs(2) - 1)
    def _():
        o_ref[...] = (acc_ref[...] + b_ref[...]).astype(o_ref.dtype)


def prepare_mfm_head_params(weight, bias, compute_dtype=None):
    """One-time re-layout of the nn.Linear params for the Pallas kernel.

    weight: (output_size, input_size) PyTorch Linear layout
    bias:   (output_size,)
    Returns (w_kn, bias2d, out_size) where
      w_kn   : (input_size, N_pad)  -- K on sublanes, N lane-dense (128-mult)
      bias2d : (1, N_pad) float32
    Call this once at init / weight-load time, NOT per forward call.
    """
    out_size, in_size = weight.shape
    n_pad = _round_up(out_size, 128)
    w_kn = jnp.transpose(weight)  # (in_size, out_size)
    if n_pad != out_size:
        w_kn = jnp.pad(w_kn, ((0, 0), (0, n_pad - out_size)))
        b_p = jnp.pad(bias, (0, n_pad - out_size))
    else:
        b_p = bias
    if compute_dtype is not None:
        w_kn = w_kn.astype(compute_dtype)
    bias2d = b_p.reshape(1, n_pad).astype(jnp.float32)
    return w_kn, bias2d, out_size


@functools.partial(jax.jit, static_argnames=("out_size",))
def mfm_head_l1_forward(x, w_kn, bias2d, *, out_size):
    """Pallas implementation of MFMHead_L1.forward (a single Linear layer).

    x:      (batch, seq, input_size)
    w_kn:   (input_size, N_pad)   from prepare_mfm_head_params
    bias2d: (1, N_pad) float32    from prepare_mfm_head_params
    returns (batch, seq, out_size) in x.dtype
    """
    bs, seq, in_size = x.shape
    assert w_kn.shape[0] == in_size
    n_pad = w_kn.shape[1]
    m = bs * seq

    # ---- tile selection ----------------------------------------------------
    # Rows: pad only to a sublane multiple (<=7 junk rows); ragged last M
    # block is masked by Pallas.
    m_pad = _round_up(m, 8)
    tm = min(512, m_pad)

    # Lane-dense output tile; prefer 256/512 so the 2x256x256 MXU on v6e/v7x
    # is filled (128 is already matched on v5e).
    if n_pad % 512 == 0:
        tn = 512
    elif n_pad % 256 == 0:
        tn = 256
    else:
        tn = 128
    tn = min(tn, n_pad)

    # Reduction tile: keep full K resident when small, tile otherwise.
    if in_size <= 1024 or in_size % 128 != 0:
        # TODO(synk): K > 1024 that is not a 128-multiple keeps full K resident.
        tk = in_size
    elif in_size % 1024 == 0:
        tk = 1024
    elif in_size % 512 == 0:
        tk = 512
    elif in_size % 256 == 0:
        tk = 256
    else:
        tk = 128

    m_tiles = _cdiv(m_pad, tm)
    n_tiles = n_pad // tn
    k_tiles = in_size // tk

    # v7x has 2 TensorCores: make sure the parallel axes expose >=2 tiles
    # whenever there is enough work to split.
    if m_tiles * n_tiles < 2 and tm > 8:
        tm = max(8, _round_up(tm // 2, 8))
        m_tiles = _cdiv(m_pad, tm)

    # ---- inputs ------------------------------------------------------------
    x2d = x.reshape(m, in_size)
    if m_pad != m:
        x2d = jnp.pad(x2d, ((0, m_pad - m), (0, 0)))  # <= 7 rows, cheap

    cost = pl.CostEstimate(
        flops=2 * m * in_size * out_size,
        transcendentals=0,
        bytes_accessed=(
            x2d.size * x2d.dtype.itemsize
            + w_kn.size * w_kn.dtype.itemsize
            + bias2d.size * 4
            + m_pad * n_pad * x.dtype.itemsize
        ),
    )

    out = pl.pallas_call(
        _linear_kernel,
        out_shape=jax.ShapeDtypeStruct((m_pad, n_pad), x.dtype),
        grid_spec=pltpu.PrefetchScalarGridSpec(
            num_scalar_prefetch=0,
            grid=(m_tiles, n_tiles, k_tiles),
            in_specs=[
                pl.BlockSpec((tm, tk), lambda i, j, k: (i, k)),   # x rows
                pl.BlockSpec((tk, tn), lambda i, j, k: (k, j)),   # weight (K,N)
                pl.BlockSpec((1, tn), lambda i, j, k: (0, j)),    # bias
            ],
            out_specs=pl.BlockSpec((tm, tn), lambda i, j, k: (i, j)),
            scratch_shapes=[pltpu.VMEM((tm, tn), jnp.float32)],
        ),
        compiler_params=pltpu.CompilerParams(
            # M, N independent -> both TCs on v7x; K is the reduction.
            dimension_semantics=("parallel", "parallel", "arbitrary"),
            # Tiles above use ~<=12 MiB with double-buffering: safe on every
            # generation (v7x scoped default 32 MiB of 64 MiB physical).
            vmem_limit_bytes=32 * 1024 * 1024,
        ),
        cost_estimate=cost,
    )(x2d, w_kn, bias2d)

    # Drop row / lane padding and restore (batch, seq, output_size).
    return out[:m, :out_size].reshape(bs, seq, out_size)


def init_mfm_head_params(key, input_size, output_size):
    """Deterministic init mirroring MFMHead_L1._init_weights:
    Linear weight ~ Normal(0, 0.02), bias = 0 (PyTorch layout)."""
    weight = 0.02 * jax.random.normal(
        key, (output_size, input_size), dtype=jnp.float32
    )
    bias = jnp.zeros((output_size,), dtype=jnp.float32)
    return weight, bias


if __name__ == "__main__":
    # Small shapes consistent with the module's forward (3D feature tensor):
    # batch=2, seq=8, input_size (hidden)=32, output_size=48.
    batch, seq, input_size, output_size = 2, 8, 32, 48

    key = jax.random.PRNGKey(0)
    k_x, k_w = jax.random.split(key)

    x = jax.random.normal(k_x, (batch, seq, input_size), dtype=jnp.float32)
    weight, bias = init_mfm_head_params(k_w, input_size, output_size)

    ref = x @ weight.T + bias  # plain-JAX nn.Linear semantics

    # --- f32 path (bit-accurate-ish to the PyTorch module) ------------------
    w_kn, b2d, osz = prepare_mfm_head_params(weight, bias)  # one-time re-layout
    out = mfm_head_l1_forward(x, w_kn, b2d, out_size=osz)
    out = jax.block_until_ready(out)
    assert out.shape == (batch, seq, output_size)
    assert jnp.allclose(out, ref, atol=1e-5, rtol=1e-5)

    # --- optional bf16 compute path (f32 accumulation), looser tolerance ----
    w_kn_bf16, b2d_bf16, osz = prepare_mfm_head_params(
        weight, bias, compute_dtype=jnp.bfloat16
    )
    out_bf16 = mfm_head_l1_forward(x, w_kn_bf16, b2d_bf16, out_size=osz)
    out_bf16 = jax.block_until_ready(out_bf16)
    assert jnp.allclose(out_bf16, ref, atol=1e-2, rtol=1e-2)

    # TODO(synk): loss_fn (L1 loss vs gt_vid_spec) and anneal_weights are
    # training-time / host-side utilities, not part of forward(); not
    # implemented as kernels here.
    print("KERNEL_OK")
</pallas_src>

<mosaic_0001>
module attributes {stable_mosaic.version = 11 : i64} {
  func.func @_linear_kernel(%arg0: i32, %arg1: i32, %arg2: i32, %arg3: memref<8x32xf32, #tpu.memory_space<vmem>>, %arg4: memref<32x128xf32, #tpu.memory_space<vmem>>, %arg5: memref<1x128xf32, #tpu.memory_space<vmem>>, %arg6: memref<8x128xf32, #tpu.memory_space<vmem>>, %arg7: memref<8x128xf32, #tpu.memory_space<vmem>>) attributes {dimension_semantics = [#tpu.dimension_semantics<parallel>, #tpu.dimension_semantics<parallel>, #tpu.dimension_semantics<arbitrary>], iteration_bounds = array<i64: 2, 1, 1>, scalar_prefetch = 0 : i64, scratch_operands = 1 : i64, tpu.core_type = #tpu.core_type<tc>, window_params = [{transform_indices = @transform_0, window_bounds = array<i64: 8, 32>}, {transform_indices = @transform_1, window_bounds = array<i64: 32, 128>}, {transform_indices = @transform_2, window_bounds = array<i64: 1, 128>}, {transform_indices = @transform_3, window_bounds = array<i64: 8, 128>}]} {
    %c0_i32 = arith.constant 0 : i32
    %0 = arith.cmpi eq, %arg2, %c0_i32 : i32
    %1 = arith.extui %0 : i1 to i32
    %c0_i32_0 = arith.constant 0 : i32
    %2 = arith.cmpi ne, %1, %c0_i32_0 : i32
    scf.if %2 {
      %cst_10 = arith.constant 0.000000e+00 : f32
      %12 = vector.broadcast %cst_10 : f32 to vector<8x128xf32>
      %c0_11 = arith.constant 0 : index
      %c0_12 = arith.constant 0 : index
      %13 = vector.load %arg7[%c0_11, %c0_12] : memref<8x128xf32, #tpu.memory_space<vmem>>, vector<8x128xf32>
      tpu.vector_store %arg7[%c0_11, %c0_12], %12 {strides = array<i32>} : memref<8x128xf32, #tpu.memory_space<vmem>>, vector<8x128xf32>,
    } else {
    }
    %c0 = arith.constant 0 : index
    %c0_1 = arith.constant 0 : index
    %3 = vector.load %arg7[%c0, %c0_1] : memref<8x128xf32, #tpu.memory_space<vmem>>, vector<8x128xf32>
    %c0_2 = arith.constant 0 : index
    %c0_3 = arith.constant 0 : index
    %4 = vector.load %arg3[%c0_2, %c0_3] : memref<8x32xf32, #tpu.memory_space<vmem>>, vector<8x32xf32>
    %c0_4 = arith.constant 0 : index
    %c0_5 = arith.constant 0 : index
    %5 = vector.load %arg4[%c0_4, %c0_5] : memref<32x128xf32, #tpu.memory_space<vmem>>, vector<32x128xf32>
    %cst = arith.constant dense<0.000000e+00> : vector<8x128xf32>
    %6 = tpu.matmul %4, %5, %cst {dimension_numbers = #tpu.dot_dimension_numbers<[1], [0], [0], [1], [0, 0, 1, 1], [], []>} : vector<8x32xf32>, vector<32x128xf32>, vector<8x128xf32> -> vector<8x128xf32>
    %7 = arith.addf %3, %6 : vector<8x128xf32>
    %c0_6 = arith.constant 0 : index
    %c0_7 = arith.constant 0 : index
    %8 = vector.load %arg7[%c0_6, %c0_7] : memref<8x128xf32, #tpu.memory_space<vmem>>, vector<8x128xf32>
    tpu.vector_store %arg7[%c0_6, %c0_7], %7 {strides = array<i32>} : memref<8x128xf32, #tpu.memory_space<vmem>>, vector<8x128xf32>,
    %c0_i32_8 = arith.constant 0 : i32
    %9 = arith.cmpi eq, %arg2, %c0_i32_8 : i32
    %10 = arith.extui %9 : i1 to i32
    %c0_i32_9 = arith.constant 0 : i32
    %11 = arith.cmpi ne, %10, %c0_i32_9 : i32
    scf.if %11 {
      %c0_10 = arith.constant 0 : index
      %c0_11 = arith.constant 0 : index
      %12 = vector.load %arg7[%c0_10, %c0_11] : memref<8x128xf32, #tpu.memory_space<vmem>>, vector<8x128xf32>
      %c0_12 = arith.constant 0 : index
      %c0_13 = arith.constant 0 : index
      %13 = vector.load %arg5[%c0_12, %c0_13] : memref<1x128xf32, #tpu.memory_space<vmem>>, vector<1x128xf32>
      %14 = vector.broadcast %13 : vector<1x128xf32> to vector<8x128xf32>
      %15 = arith.addf %12, %14 : vector<8x128xf32>
      %c0_14 = arith.constant 0 : index
      %c0_15 = arith.constant 0 : index
      %16 = vector.load %arg6[%c0_14, %c0_15] : memref<8x128xf32, #tpu.memory_space<vmem>>, vector<8x128xf32>
      tpu.vector_store %arg6[%c0_14, %c0_15], %15 {strides = array<i32>} : memref<8x128xf32, #tpu.memory_space<vmem>>, vector<8x128xf32>,
    } else {
    }
    return
  }
  func.func @transform_0(%arg0: i32, %arg1: i32, %arg2: i32) -> (i32, i32) {
    %c0_i32 = arith.constant 0 : i32
    return %arg0, %arg2 : i32, i32
  }
  func.func @transform_1(%arg0: i32, %arg1: i32, %arg2: i32) -> (i32, i32) {
    %c0_i32 = arith.constant 0 : i32
    return %arg2, %arg1 : i32, i32
  }
  func.func @transform_2(%arg0: i32, %arg1: i32, %arg2: i32) -> (i32, i32) {
    %c0_i32 = arith.constant 0 : i32
    %c0_i32_0 = arith.constant 0 : i32
    return %c0_i32, %arg1 : i32, i32
  }
  func.func @transform_3(%arg0: i32, %arg1: i32, %arg2: i32) -> (i32, i32) {
    %c0_i32 = arith.constant 0 : i32
    return %arg0, %arg1 : i32, i32
  }
}

</mosaic_0001>

<llo_original>
// kernel: mfm_head_l1_forward.1
$region0: #{mfm_head_l1_forward.1}
  #allocation0 [shape = 'u32[]', space=smem, size = 0x4, offset = 0x4, fixed_abs, tag = 'smem constant byte address 0x4 - core index']
  #allocation1 [shape = 'u32[72,128]{1,0:T(1,128)}', space=vmem, size = 0x9000, scoped, tag = 'internal scratch']
  #allocation2 [shape = 'f32[8,128]{1,0:T(8,128)}', space=vmem, size = 0x1000, scoped, tag = 'scratch operand']
  %s0 = inlined_call_operand.hbm [shape: f32[16,32], index: 0, kind: input, shape index: {}]
  %s1 = inlined_call_operand.hbm [shape: f32[32,128], index: 1, kind: input, shape index: {}]
  %s2 = inlined_call_operand.vmem [shape: f32[1,128], index: 2, kind: input, shape index: {}]
  %s3 = inlined_call_operand.vmem [shape: f32[16,128], index: 3, kind: output, shape index: {}]
  %s4 = sld [smem:[#allocation0]]
  $region61: #{mfm_head_l1_forward.1} parent=0
    _
  %s6 = ssub.s32 1, %s4
  %s7 = scalar_select 0, %s6, %s4
  $region1: #{mfm_head_l1_forward.1} parent=0
    #allocation3 [shape = 'u8[8192]{0}', space=vmem, size = 0x2000, scoped, tag = 'input window, operand 0']
    #allocation4 [shape = 's32[2]{0}', space=sflag, size = 0x8, scoped, tag = 'scoped memory for mfm_head_l1_forward.1']
    #allocation5 [shape = 'u8[16384]{0}', space=vmem, size = 0x4000, scoped, tag = 'input window, operand 1, single buffered']
    #allocation6 [shape = 's32[1]{0}', space=sflag, size = 0x4, scoped, tag = 'scoped memory for mfm_head_l1_forward.1']
    %8 = vsyncpa [#allocation4], 0
    %s9 = scalar_lea.sflag [#allocation4], 1
    %10 = vsyncpa %s9, 0
    %11 = vsyncpa [#allocation6], 0
    loop: start=0, step=1, limit=4
    $region2: #{mfm_head_l1_forward.1} parent=1 // loop_pre_header
      _
    $region3: #{mfm_head_l1_forward.1} parent=1 // loop_header
      %s13 = sphi 0, %s17
      %p14 = scmp.ge.s32.totalorder %s13, 4
      %s20 = sphi 0, %s39
      %s21 = sphi 0, %s35
      %s22 = sphi 0, %s31
      %s23 = sphi 0, %s20
      %s24 = sphi 0, %s21
      %s25 = sphi 0, %s22
      %s26 = sphi 0, %s23
      %s27 = sphi 0, %s24
      %s28 = sphi 0, %s25
      %s44 = sphi 0, %s46
      %s47 = sphi 0, %s44
      %s48 = sphi 0, %s47
      %s64 = sphi 0, %s48
      %s72 = sphi 0, %s74
      %s75 = sphi 0, %s72
      %s76 = sphi 0, %s75
      %s92 = sphi 0, %s76
      %s98 = sphi 0, %s100
      %s101 = sphi 0, %s98
      %s102 = sphi 0, %s101
      %s118 = sphi 0, %s102
      %s126 = sphi 0, %s128
      %s129 = sphi 0, %s126
      %s130 = sphi 0, %s129
      %s146 = sphi 0, %s130
    $region4: #{mfm_head_l1_forward.1} parent=1 // loop_header_branch
      %16 = sbr.rel (%p14) target = $region8
    $region5: #{mfm_head_l1_forward.1} parent=1 // loop_body
      %s18 = ssub.s32 %s13, 1
      %s19 = ssub.s32 %s13, 2
      %s29 = sadd.s32 1, %s22
      %p30 = scmp.ge.s32.totalorder %s29, 1
      %s31 = scalar_select %p30, 0, %s29
      %s32 = sadd.s32 1, %s21
      %s33 = scalar_select %p30, %s32, %s21
      %p34 = scmp.ge.s32.totalorder %s33, 1
      %s35 = scalar_select %p34, 0, %s33
      %s36 = sadd.s32 1, %s20
      %s37 = scalar_select %p34, %s36, %s20
      %p38 = scmp.ge.s32.totalorder %s37, 2
      %s39 = scalar_select %p38, 0, %s37
      %s40 = ssub.s32 %s20, %s39
      %s41 = ssub.s32 %s22, %s31
      %s42 = sor.u32 %s40, %s41
      %p43 = scmp.eq.s32.totalorder %s42, 0
      %s45 = sadd.s32 %s44, 1
      %s46 = scalar_select %p43, %s44, %s45
      %p49 = pneg %p43
      %p50 = scmp.eq.s32.totalorder %s13, 1
      %p51 = por %p49, %p50
      %p52 = scmp.ne.s32.totalorder %s44, %s47
      %p53 = scmp.eq.s32.totalorder %s13, 0
      %p54 = por %p52, %p53
      %p55 = scmp.ne.s32.totalorder %s44, %s47
      %p56 = scmp.eq.s32.totalorder %s18, 1
      %p57 = por %p55, %p56
      %p58 = scmp.ne.s32.totalorder %s47, %s48
      %p59 = scmp.eq.s32.totalorder %s18, 0
      %p60 = por %p58, %p59
      %p61 = scmp.ne.s32.totalorder %s47, %s48
      %p62 = scmp.eq.s32.totalorder %s19, 1
      %p63 = por %p61, %p62
      %p65 = scmp.ne.s32.totalorder %s48, %s64
      %p66 = scmp.eq.s32.totalorder %s19, 0
      %p67 = por %p65, %p66
      %s68 = ssub.s32 %s22, %s31
      %s69 = ssub.s32 %s21, %s35
      %s70 = sor.u32 %s68, %s69
      %p71 = scmp.eq.s32.totalorder %s70, 0
      %s73 = sadd.s32 %s72, 1
      %s74 = scalar_select %p71, %s72, %s73
      %p77 = pneg %p71
      %p78 = scmp.eq.s32.totalorder %s13, 1
      %p79 = por %p77, %p78
      %p80 = scmp.ne.s32.totalorder %s72, %s75
      %p81 = scmp.eq.s32.totalorder %s13, 0
      %p82 = por %p80, %p81
      %p83 = scmp.ne.s32.totalorder %s72, %s75
      %p84 = scmp.eq.s32.totalorder %s18, 1
      %p85 = por %p83, %p84
      %p86 = scmp.ne.s32.totalorder %s75, %s76
      %p87 = scmp.eq.s32.totalorder %s18, 0
      %p88 = por %p86, %p87
      %p89 = scmp.ne.s32.totalorder %s75, %s76
      %p90 = scmp.eq.s32.totalorder %s19, 1
      %p91 = por %p89, %p90
      %p93 = scmp.ne.s32.totalorder %s76, %s92
      %p94 = scmp.eq.s32.totalorder %s19, 0
      %p95 = por %p93, %p94
      %s96 = ssub.s32 %s21, %s35
      %p97 = scmp.eq.s32.totalorder %s96, 0
      %s99 = sadd.s32 %s98, 1
      %s100 = scalar_select %p97, %s98, %s99
      %p103 = pneg %p97
      %p104 = scmp.eq.s32.totalorder %s13, 1
      %p105 = por %p103, %p104
      %p106 = scmp.ne.s32.totalorder %s98, %s101
      %p107 = scmp.eq.s32.totalorder %s13, 0
      %p108 = por %p106, %p107
      %p109 = scmp.ne.s32.totalorder %s98, %s101
      %p110 = scmp.eq.s32.totalorder %s18, 1
      %p111 = por %p109, %p110
      %p112 = scmp.ne.s32.totalorder %s101, %s102
      %p113 = scmp.eq.s32.totalorder %s18, 0
      %p114 = por %p112, %p113
      %p115 = scmp.ne.s32.totalorder %s101, %s102
      %p116 = scmp.eq.s32.totalorder %s19, 1
      %p117 = por %p115, %p116
      %p119 = scmp.ne.s32.totalorder %s102, %s118
      %p120 = scmp.eq.s32.totalorder %s19, 0
      %p121 = por %p119, %p120
      %s122 = ssub.s32 %s20, %s39
      %s123 = ssub.s32 %s21, %s35
      %s124 = sor.u32 %s122, %s123
      %p125 = scmp.eq.s32.totalorder %s124, 0
      %s127 = sadd.s32 %s126, 1
      %s128 = scalar_select %p125, %s126, %s127
      %p131 = pneg %p125
      %p132 = scmp.eq.s32.totalorder %s13, 1
      %p133 = por %p131, %p132
      %p134 = scmp.ne.s32.totalorder %s126, %s129
      %p135 = scmp.eq.s32.totalorder %s13, 0
      %p136 = por %p134, %p135
      %p137 = scmp.ne.s32.totalorder %s126, %s129
      %p138 = scmp.eq.s32.totalorder %s18, 1
      %p139 = por %p137, %p138
      %p140 = scmp.ne.s32.totalorder %s129, %s130
      %p141 = scmp.eq.s32.totalorder %s18, 0
      %p142 = por %p140, %p141
      %p143 = scmp.ne.s32.totalorder %s129, %s130
      %p144 = scmp.eq.s32.totalorder %s19, 1
      %p145 = por %p143, %p144
      %p147 = scmp.ne.s32.totalorder %s130, %s146
      %p148 = scmp.eq.s32.totalorder %s19, 0
      %p149 = por %p147, %p148
      %p150 = scmp.le.s32.totalorder 1, %s13
      %p151 = scmp.lt.s32.totalorder %s13, 3
      %p152 = pnand %p150, %p151
      %p153 = pneg %p152
      // Predicated region
      $region9: #{mfm_head_l1_forward.1} parent=5 // pred_check
        _
      $region10: #{mfm_head_l1_forward.1} parent=5 // pred_check_branch
        %155 = sbr.rel (%p152) target = $region12
      $region11: #{mfm_head_l1_forward.1} parent=5 // pred_region
        %s156 = ssub.s32 %s13, 1
        // Predicated region
        $region13: #{mfm_head_l1_forward.1} parent=11 // pred_check
          %p157 = pneg %p88
        $region14: #{mfm_head_l1_forward.1} parent=11 // pred_check_branch
          %159 = sbr.rel (%p157) target = $region16
        $region15: #{mfm_head_l1_forward.1} parent=11 // pred_region
          %s160 = smul.u32 4, %s25
          %162 = vsyncadd [#allocation6], 0
          %s163 = sadd.s32 %s24, %s160
          %s164 = smul.addr %s163, 8
          %s165 = scalar_lea.hbm %s1, %s164
          %s166 = sshll.u32 %s165, 4
          %s167 = int_to_ptr.hbm [resolvable:$true] %s166
          %s168 = sshll.u32 [#allocation5], 4
          %s169 = int_to_ptr.vmem [resolvable:$true] %s168
          %174 = dma.hbm_to_vmem [thread:$0]  %s167, 512, %s169, [#allocation6], 128, 128, 8
        $region16: #{mfm_head_l1_forward.1} parent=11 // pred_fallthru
          _
        // Predicated region
        $region17: #{mfm_head_l1_forward.1} parent=11 // pred_check
          %p175 = pneg %p114
        $region18: #{mfm_head_l1_forward.1} parent=11 // pred_check_branch
          %177 = sbr.rel (%p175) target = $region20
        $region19: #{mfm_head_l1_forward.1} parent=11 // pred_region
          %p178 = scmp.lt.s32.totalorder %s24, 0
          %s179 = scalar_select %p178, %s24, 0
          %s180 = scalar_lea.vmem %s2, %s179
        $region20: #{mfm_head_l1_forward.1} parent=11 // pred_fallthru
          _
      $region12: #{mfm_head_l1_forward.1} parent=5 // pred_fallthru
        _
      %p181 = scmp.lt.s32.totalorder %s13, 2
      // Predicated region
      $region21: #{mfm_head_l1_forward.1} parent=5 // pred_check
        %p182 = pneg %p181
      $region22: #{mfm_head_l1_forward.1} parent=5 // pred_check_branch
        %184 = sbr.rel (%p182) target = $region24
      $region23: #{mfm_head_l1_forward.1} parent=5 // pred_region
        // Predicated region
        $region25: #{mfm_head_l1_forward.1} parent=23 // pred_check
          %p185 = pneg %p54
        $region26: #{mfm_head_l1_forward.1} parent=23 // pred_check_branch
          %187 = sbr.rel (%p185) target = $region28
        $region27: #{mfm_head_l1_forward.1} parent=23 // pred_region
          %s188 = sand.u32 %s44, 1
          %s189 = scalar_lea.sflag [#allocation4], %s188
          %s190 = sand.u32 %s44, 1
          %s191 = smul.addr %s190, 8
          %s192 = scalar_lea.vmem [#allocation3], %s191
          %194 = vsyncadd %s189, 0
          %s195 = sadd.s32 %s22, %s20
          %s196 = smul.addr %s195, 8
          %s197 = scalar_lea.hbm %s0, %s196
          %s199 = sshll.u32 %s197, 4
          %s200 = int_to_ptr.hbm [resolvable:$true] %s199
          %s201 = sshll.u32 %s192, 4
          %s202 = int_to_ptr.vmem [resolvable:$true] %s201
          %204 = dma.hbm_to_vmem [thread:$0]  %s200, 128, %s202, %s189
        $region28: #{mfm_head_l1_forward.1} parent=23 // pred_fallthru
          _
      $region24: #{mfm_head_l1_forward.1} parent=5 // pred_fallthru
        _
      %p205 = scmp.le.s32.totalorder 1, %s13
      %p206 = scmp.lt.s32.totalorder %s13, 3
      %p207 = pnand %p205, %p206
      %p208 = pneg %p207
      // Predicated region
      $region29: #{mfm_head_l1_forward.1} parent=5 // pred_check
        _
      $region30: #{mfm_head_l1_forward.1} parent=5 // pred_check_branch
        %210 = sbr.rel (%p207) target = $region32
      $region31: #{mfm_head_l1_forward.1} parent=5 // pred_region
        %s211 = ssub.s32 %s13, 1
        %s212 = sand.u32 %s47, 1
        %s213 = scalar_lea.sflag [#allocation4], %s212
        %s214 = sand.u32 %s47, 1
        %s215 = smul.addr %s214, 8
        %s216 = scalar_lea.vmem [#allocation3], %s215
        // Predicated region
        $region33: #{mfm_head_l1_forward.1} parent=31 // pred_check
          %p217 = pneg %p60
        $region34: #{mfm_head_l1_forward.1} parent=31 // pred_check_branch
          %219 = sbr.rel (%p217) target = $region36
        $region35: #{mfm_head_l1_forward.1} parent=31 // pred_region
          %221 = dma.done %s213, 128
        $region36: #{mfm_head_l1_forward.1} parent=31 // pred_fallthru
          _
        // Predicated region
        $region37: #{mfm_head_l1_forward.1} parent=31 // pred_check
          %p222 = pneg %p88
        $region38: #{mfm_head_l1_forward.1} parent=31 // pred_check_branch
          %224 = sbr.rel (%p222) target = $region40
        $region39: #{mfm_head_l1_forward.1} parent=31 // pred_region
          %226 = dma.done [#allocation6], 512
        $region40: #{mfm_head_l1_forward.1} parent=31 // pred_fallthru
          _
        %s227 = sand.u32 %s47, 1
        %s228 = scalar_lea.sflag [#allocation4], %s227
        %s229 = sand.u32 %s47, 1
        %s230 = smul.addr %s229, 8
        %s231 = scalar_lea.vmem [#allocation3], %s230
        %p232 = pneg %p60
        %p233 = pneg %p57
        %p234 = pneg %p88
        %p235 = pneg %p85
        %p236 = scmp.lt.s32.totalorder %s24, 0
        %s237 = scalar_select %p236, %s24, 0
        %s238 = scalar_lea.vmem %s2, %s237
        %p239 = pneg %p114
        %p240 = pneg %p111
        %p241 = pneg %p142
        %p242 = pneg %p139
        %p243 = scmp.lt.s32.totalorder %s23, 1
        %s244 = scalar_select %p243, %s23, 1
        %p245 = scmp.lt.s32.totalorder %s24, 0
        %s246 = scalar_select %p245, %s24, 0
        %s247 = sadd.s32 %s246, %s244
        %s248 = smul.addr %s247, 8
        %s249 = scalar_lea.vmem %s3, %s248
        %s250 = smul.u32 4, %s25
        %p251 = scmp.lt.s32.totalorder %s24, 0
        %s252 = scalar_select %p251, %s24, 0
        %s253 = scalar_lea.vmem %s2, %s252
        %p254 = scmp.lt.s32.totalorder %s23, 1
        %s255 = scalar_select %p254, %s23, 1
        %p256 = scmp.lt.s32.totalorder %s24, 0
        %s257 = scalar_select %p256, %s24, 0
        %s258 = sadd.s32 %s257, %s255
        %s259 = smul.addr %s258, 8
        %s260 = scalar_lea.vmem %s3, %s259
        %p261 = scmp.eq.s32.totalorder %s25, 0
        // Predicated region
        $region41: #{mfm_head_l1_forward.1} parent=31 // pred_check
          %p262 = pneg %p261
        $region42: #{mfm_head_l1_forward.1} parent=31 // pred_check_branch
          %264 = sbr.rel (%p262) target = $region44
        $region43: #{mfm_head_l1_forward.1} parent=31 // pred_region
          %265 = vst [vmem:[#allocation2] sm:$0xff] 0.0
        $region44: #{mfm_head_l1_forward.1} parent=31 // pred_fallthru
          _
        %v266 = vld [vmem:[#allocation2] sm:$0xff]
        %v267 = vld [vmem:[%s216] sm:$0xff]
        %v268 = vld [vmem:[#allocation5] sm:$0xff]
        %v269 = vld [vmem:[#allocation5 + $0x8] sm:$0xff]
        %v270 = vld [vmem:[#allocation5 + $0x10] sm:$0xff]
        %v271 = vld [vmem:[#allocation5 + $0x18] sm:$0xff]
        %vm272 = vcmask 261120
        %v274 = vsel %vm272, %v267, 0
        %276 = vmatpush.msra.mxu0 0.0
        %277 = vmatpush.msra.mxu0 0.0
        %278 = vmatpush.msra.mxu0 0.0
        %279 = vmatpush.msra.mxu0 0.0
        %280 = vmatpush.msra.mxu0 0.0
        %281 = vmatpush.msra.mxu0 0.0
        %282 = vmatpush.msra.mxu0 0.0
        %283 = vmatpush.msra.mxu0 0.0
        %284 = vmatpush.msra.mxu0 0.0
        %285 = vmatpush.msra.mxu0 0.0
        %286 = vmatpush.msra.mxu0 0.0
        %287 = vmatpush.msra.mxu0 0.0
        %288 = vmatpush.msra.mxu0 %v271
        %289 = vmatpush.msra.mxu0 %v270
        %290 = vmatpush.msra.mxu0 %v269
        %291 = vmatpush.msra.mxu0 %v268
        %292 = vmatmul.f32.gmra.mxu0 %v274
        %v293 = vpop.f32.mrf.mxu0
        %v294 = vadd.f32 0.0, %v293
        %295 = vdwg.mxu0
        %v296 = vadd.f32 %v266, %v294
        %297 = vst [vmem:[#allocation2] sm:$0xff] %v296
        // Predicated region
        $region45: #{mfm_head_l1_forward.1} parent=31 // pred_check
          %p298 = pneg %p261
        $region46: #{mfm_head_l1_forward.1} parent=31 // pred_check_branch
          %300 = sbr.rel (%p298) target = $region48
        $region47: #{mfm_head_l1_forward.1} parent=31 // pred_region
          %v301 = vld [vmem:[#allocation2] sm:$0xff]
          %v302 = vld [vmem:[%s253] sm:$0x1]
          %v304 = vperm.slane %v302, 0
          %v306 = vadd.f32 %v301, %v304
          %307 = vst [vmem:[%s260] sm:$0xff] %v306
        $region48: #{mfm_head_l1_forward.1} parent=31 // pred_fallthru
          _
        %p308 = scmp.lt.s32.totalorder %s23, 1
        %s309 = scalar_select %p308, %s23, 1
        %p310 = scmp.lt.s32.totalorder %s24, 0
        %s311 = scalar_select %p310, %s24, 0
        %s312 = sadd.s32 %s311, %s309
        %s313 = smul.addr %s312, 8
        %s314 = scalar_lea.vmem %s3, %s313
        // Predicated region
        $region49: #{mfm_head_l1_forward.1} parent=31 // pred_check
          %p315 = pneg %p139
        $region50: #{mfm_head_l1_forward.1} parent=31 // pred_check_branch
          %317 = sbr.rel (%p315) target = $region52
        $region51: #{mfm_head_l1_forward.1} parent=31 // pred_region
          _
        $region52: #{mfm_head_l1_forward.1} parent=31 // pred_fallthru
          _
      $region32: #{mfm_head_l1_forward.1} parent=5 // pred_fallthru
        _
      %p318 = scmp.le.s32.totalorder 2, %s13
      // Predicated region
      $region53: #{mfm_head_l1_forward.1} parent=5 // pred_check
        %p319 = pneg %p318
      $region54: #{mfm_head_l1_forward.1} parent=5 // pred_check_branch
        %321 = sbr.rel (%p319) target = $region56
      $region55: #{mfm_head_l1_forward.1} parent=5 // pred_region
        %s322 = ssub.s32 %s13, 2
        // Predicated region
        $region57: #{mfm_head_l1_forward.1} parent=55 // pred_check
          %p323 = pneg %p145
        $region58: #{mfm_head_l1_forward.1} parent=55 // pred_check_branch
          %325 = sbr.rel (%p323) target = $region60
        $region59: #{mfm_head_l1_forward.1} parent=55 // pred_region
          %p326 = scmp.lt.s32.totalorder %s26, 1
          %s327 = scalar_select %p326, %s26, 1
          %p328 = scmp.lt.s32.totalorder %s27, 0
          %s329 = scalar_select %p328, %s27, 0
          %s330 = sadd.s32 %s329, %s327
          %s331 = smul.addr %s330, 8
          %s332 = scalar_lea.vmem %s3, %s331
        $region60: #{mfm_head_l1_forward.1} parent=55 // pred_fallthru
          _
      $region56: #{mfm_head_l1_forward.1} parent=5 // pred_fallthru
        _
    $region6: #{mfm_head_l1_forward.1} parent=1 // loop_footer
      %s17 = sadd.s32 1, %s13
    $region7: #{mfm_head_l1_forward.1} parent=1 // loop_footer_branch
      %12 = sbr.rel target = $region3
    $region8: #{mfm_head_l1_forward.1} parent=1 // loop_exit
      _
    %333 = vsyncpa [#allocation4], 1
    %s334 = scalar_lea.sflag [#allocation4], 1
    %335 = vsyncpa %s334, 1
    %336 = vsyncpa [#allocation6], 1

</llo_original>
